<compile_context>
chip_gen: v7x
topology: tpu7x:2x2x1
jax: 0.10.0
libtpu: 0.0.40
codegen_flags: <defaults>
</compile_context>

<pallas_src>
import jax
import jax.numpy as jnp
from jax.experimental import pallas as pl
from jax.experimental.pallas import tpu as pltpu

HIDDEN = 128
LANE = 128  # TPU lane width: the action head is padded to this for dense vst


def dqn_mlp_kernel(x_ref, w1_ref, b1_ref, w2_ref, b2_ref, w3_ref, b3_ref, o_ref):
    # One (tb, in_dim) batch tile per grid step; all weights VMEM-resident.
    x = x_ref[...].astype(jnp.bfloat16)                                # f32 -> bf16 (VPU, free)
    h1 = jnp.dot(x, w1_ref[...], preferred_element_type=jnp.float32) + b1_ref[...]
    h1 = jnp.maximum(h1, 0.0)                                          # f32 VPU
    h2 = jnp.dot(h1.astype(jnp.bfloat16), w2_ref[...],
                 preferred_element_type=jnp.float32) + b2_ref[...]
    h2 = jnp.maximum(h2, 0.0)
    q = jnp.dot(h2.astype(jnp.bfloat16), w3_ref[...],
                preferred_element_type=jnp.float32) + b3_ref[...]
    o_ref[...] = q.astype(o_ref.dtype)                                 # lane-dense (tb, 128) bf16 store


def _default_tb(batch):
    """Adaptive batch tile.

    <= 1024 rows: one grid step (no per-step overhead; whole problem fits VMEM).
    >  1024 rows: ~half the batch per step (>= 2 steps so v7x's 2 TensorCores
    both get work), capped at 2048 rows so the per-step footprint stays well
    under every generation's scoped-VMEM default.
    """
    b8 = pl.cdiv(batch, 8) * 8
    if b8 <= 1024:
        return b8
    return min(2048, pl.cdiv(b8, 2 * 8) * 8)


def dqn_forward(x, params, n_actions, *, tb=None):
    """x: [B, input_dim] float32 -> q-values [B, n_actions] float32.

    `params` must be the padded/bf16 kernel params from `prepare_params`.
    `tb` (batch tile) defaults to an adaptive choice; override only for tuning.
    """
    w1, b1, w2, b2, w3, b3 = params
    B, in_dim = x.shape
    assert in_dim == w1.shape[0]
    out_pad = w3.shape[1]          # 128 (lane-padded action head)

    if tb is None:
        tb = _default_tb(B)
    tb = max(8, pl.cdiv(tb, 8) * 8)              # sublane-aligned tile
    b_pad = pl.cdiv(B, tb) * tb
    if b_pad != B:
        x = jnp.pad(x, ((0, b_pad - B), (0, 0)))  # batch pad only (no feature pad)

    grid = (b_pad // tb,)
    resident = lambda a: pl.BlockSpec(a.shape, lambda i: (0,) * a.ndim)

    weight_bytes = sum(int(a.size) * a.dtype.itemsize for a in (w1, b1, w2, b2, w3, b3))
    bytes_accessed = b_pad * in_dim * 4 + weight_bytes + b_pad * out_pad * 2
    cost = pl.CostEstimate(
        flops=2 * b_pad * (in_dim * HIDDEN + HIDDEN * HIDDEN + HIDDEN * out_pad),
        transcendentals=0,
        bytes_accessed=bytes_accessed,
    )

    # Per-step VMEM footprint: double-buffered x tile + double-buffered out
    # tile + resident weights.  Only raise the scoped limit if we'd blow the
    # default (keeps v7x's smaller 64 MiB VMEM happy at normal sizes).
    step_bytes = 2 * tb * in_dim * 4 + 2 * tb * out_pad * 2 + weight_bytes
    vmem_limit = None
    if step_bytes > 12 * 1024 * 1024:
        vmem_limit = min(step_bytes + 8 * 1024 * 1024, 100 * 1024 * 1024)

    q_pad = pl.pallas_call(
        dqn_mlp_kernel,
        out_shape=jax.ShapeDtypeStruct((b_pad, out_pad), jnp.bfloat16),
        grid=grid,
        in_specs=[
            pl.BlockSpec((tb, in_dim), lambda i: (i, 0)),   # batch tile of raw f32 x
            resident(w1), resident(b1),
            resident(w2), resident(b2),
            resident(w3), resident(b3),
        ],
        out_specs=pl.BlockSpec((tb, out_pad), lambda i: (i, 0)),
        compiler_params=pltpu.CompilerParams(
            dimension_semantics=("parallel",),              # v7x: shard across 2 TCs
            vmem_limit_bytes=vmem_limit,
        ),
        cost_estimate=cost,
    )(x, w1, b1, w2, b2, w3, b3)

    # Cheap XLA slice back to the logical (B, n_actions), upcast to f32.
    return q_pad[:B, :n_actions].astype(jnp.float32)


def init_params(key, input_dim, hidden, n_actions):
    """Deterministic synthetic f32 init (uniform, fan-in scaled, like torch Linear)."""
    ks = jax.random.split(key, 6)

    def lin(kw, kb, fan_in, fan_out):
        bound = 1.0 / jnp.sqrt(jnp.float32(fan_in))
        w = jax.random.uniform(kw, (fan_in, fan_out), jnp.float32, -bound, bound)
        b = jax.random.uniform(kb, (1, fan_out), jnp.float32, -bound, bound)
        return w, b

    w1, b1 = lin(ks[0], ks[1], input_dim, hidden)
    w2, b2 = lin(ks[2], ks[3], hidden, hidden)
    w3, b3 = lin(ks[4], ks[5], hidden, n_actions)
    return (w1, b1, w2, b2, w3, b3)


def prepare_params(params, out_pad=LANE):
    """One-time prep: zero-pad the action axis to 128 lanes, weights -> bf16.

    w1 stays UNPADDED (in_dim, 128): x is passed unpadded and cast in-kernel.
    """
    w1, b1, w2, b2, w3, b3 = params
    w3p = jnp.pad(w3, ((0, 0), (0, out_pad - w3.shape[1])))
    b3p = jnp.pad(b3, ((0, 0), (0, out_pad - b3.shape[1])))
    return (
        w1.astype(jnp.bfloat16), b1.astype(jnp.float32),
        w2.astype(jnp.bfloat16), b2.astype(jnp.float32),
        w3p.astype(jnp.bfloat16), b3p.astype(jnp.float32),
    )


def ref_forward(x, kparams, n_actions):
    """Pure-JAX reference mirroring the kernel path (bf16 dots, f32 acc, bf16 store)."""
    w1, b1, w2, b2, w3, b3 = kparams
    xb = x.astype(jnp.bfloat16)
    h1 = jnp.maximum(jnp.dot(xb, w1, preferred_element_type=jnp.float32) + b1, 0.0)
    h2 = jnp.maximum(
        jnp.dot(h1.astype(jnp.bfloat16), w2, preferred_element_type=jnp.float32) + b2, 0.0)
    q = jnp.dot(h2.astype(jnp.bfloat16), w3, preferred_element_type=jnp.float32) + b3
    q = q.astype(jnp.bfloat16).astype(jnp.float32)   # mirror bf16 output store
    return q[:, :n_actions]


if __name__ == "__main__":
    # Small demo shapes: B=256 -> adaptive tile gives a single grid step
    # (the wrapper also handles B that is not a multiple of 8 / the tile).
    B, INPUT_DIM, N_ACTIONS = 256, 32, 8

    key = jax.random.PRNGKey(0)
    k_x, k_p = jax.random.split(key)

    x = jax.random.normal(k_x, (B, INPUT_DIM), dtype=jnp.float32)
    params = init_params(k_p, INPUT_DIM, HIDDEN, N_ACTIONS)
    kparams = prepare_params(params)

    q = dqn_forward(x, kparams, N_ACTIONS)
    q = jax.block_until_ready(q)

    q_ref = ref_forward(x, kparams, N_ACTIONS)
    assert q.shape == (B, N_ACTIONS)
    assert jnp.allclose(q, q_ref, atol=2e-2, rtol=2e-2), (
        float(jnp.max(jnp.abs(q - q_ref))))

    print("KERNEL_OK")
</pallas_src>

<mosaic_0001>
module attributes {stable_mosaic.version = 11 : i64} {
  func.func @dqn_mlp_kernel(%arg0: i32, %arg1: memref<256x32xf32, #tpu.memory_space<vmem>>, %arg2: memref<32x128xbf16, #tpu.memory_space<vmem>>, %arg3: memref<1x128xf32, #tpu.memory_space<vmem>>, %arg4: memref<128x128xbf16, #tpu.memory_space<vmem>>, %arg5: memref<1x128xf32, #tpu.memory_space<vmem>>, %arg6: memref<128x128xbf16, #tpu.memory_space<vmem>>, %arg7: memref<1x128xf32, #tpu.memory_space<vmem>>, %arg8: memref<256x128xbf16, #tpu.memory_space<vmem>>) attributes {dimension_semantics = [#tpu.dimension_semantics<parallel>], iteration_bounds = array<i64: 1>, scalar_prefetch = 0 : i64, scratch_operands = 0 : i64, tpu.core_type = #tpu.core_type<tc>, window_params = [{transform_indices = @transform_0, window_bounds = array<i64: 256, 32>}, {pipeline_mode = #tpu.pipeline_mode<synchronous>, transform_indices = @transform_1, window_bounds = array<i64: 32, 128>}, {pipeline_mode = #tpu.pipeline_mode<synchronous>, transform_indices = @transform_2, window_bounds = array<i64: 1, 128>}, {pipeline_mode = #tpu.pipeline_mode<synchronous>, transform_indices = @transform_3, window_bounds = array<i64: 128, 128>}, {pipeline_mode = #tpu.pipeline_mode<synchronous>, transform_indices = @transform_4, window_bounds = array<i64: 1, 128>}, {pipeline_mode = #tpu.pipeline_mode<synchronous>, transform_indices = @transform_5, window_bounds = array<i64: 128, 128>}, {pipeline_mode = #tpu.pipeline_mode<synchronous>, transform_indices = @transform_6, window_bounds = array<i64: 1, 128>}, {transform_indices = @transform_7, window_bounds = array<i64: 256, 128>}]} {
    %c0 = arith.constant 0 : index
    %c0_0 = arith.constant 0 : index
    %0 = vector.load %arg1[%c0, %c0_0] : memref<256x32xf32, #tpu.memory_space<vmem>>, vector<256x32xf32>
    %1 = arith.truncf %0 : vector<256x32xf32> to vector<256x32xbf16>
    %c0_1 = arith.constant 0 : index
    %c0_2 = arith.constant 0 : index
    %2 = vector.load %arg2[%c0_1, %c0_2] : memref<32x128xbf16, #tpu.memory_space<vmem>>, vector<32x128xbf16>
    %cst = arith.constant dense<0.000000e+00> : vector<256x128xf32>
    %3 = tpu.matmul %1, %2, %cst {dimension_numbers = #tpu.dot_dimension_numbers<[1], [0], [0], [1], [0, 0, 1, 1], [], []>} : vector<256x32xbf16>, vector<32x128xbf16>, vector<256x128xf32> -> vector<256x128xf32>
    %c0_3 = arith.constant 0 : index
    %c0_4 = arith.constant 0 : index
    %4 = vector.load %arg3[%c0_3, %c0_4] : memref<1x128xf32, #tpu.memory_space<vmem>>, vector<1x128xf32>
    %5 = vector.broadcast %4 : vector<1x128xf32> to vector<256x128xf32>
    %6 = arith.addf %3, %5 : vector<256x128xf32>
    %cst_5 = arith.constant 0.000000e+00 : f32
    %7 = vector.broadcast %cst_5 : f32 to vector<256x128xf32>
    %8 = arith.maximumf %6, %7 : vector<256x128xf32>
    %9 = arith.truncf %8 : vector<256x128xf32> to vector<256x128xbf16>
    %c0_6 = arith.constant 0 : index
    %c0_7 = arith.constant 0 : index
    %10 = vector.load %arg4[%c0_6, %c0_7] : memref<128x128xbf16, #tpu.memory_space<vmem>>, vector<128x128xbf16>
    %cst_8 = arith.constant dense<0.000000e+00> : vector<256x128xf32>
    %11 = tpu.matmul %9, %10, %cst_8 {dimension_numbers = #tpu.dot_dimension_numbers<[1], [0], [0], [1], [0, 0, 1, 1], [], []>} : vector<256x128xbf16>, vector<128x128xbf16>, vector<256x128xf32> -> vector<256x128xf32>
    %c0_9 = arith.constant 0 : index
    %c0_10 = arith.constant 0 : index
    %12 = vector.load %arg5[%c0_9, %c0_10] : memref<1x128xf32, #tpu.memory_space<vmem>>, vector<1x128xf32>
    %13 = vector.broadcast %12 : vector<1x128xf32> to vector<256x128xf32>
    %14 = arith.addf %11, %13 : vector<256x128xf32>
    %cst_11 = arith.constant 0.000000e+00 : f32
    %15 = vector.broadcast %cst_11 : f32 to vector<256x128xf32>
    %16 = arith.maximumf %14, %15 : vector<256x128xf32>
    %17 = arith.truncf %16 : vector<256x128xf32> to vector<256x128xbf16>
    %c0_12 = arith.constant 0 : index
    %c0_13 = arith.constant 0 : index
    %18 = vector.load %arg6[%c0_12, %c0_13] : memref<128x128xbf16, #tpu.memory_space<vmem>>, vector<128x128xbf16>
    %cst_14 = arith.constant dense<0.000000e+00> : vector<256x128xf32>
    %19 = tpu.matmul %17, %18, %cst_14 {dimension_numbers = #tpu.dot_dimension_numbers<[1], [0], [0], [1], [0, 0, 1, 1], [], []>} : vector<256x128xbf16>, vector<128x128xbf16>, vector<256x128xf32> -> vector<256x128xf32>
    %c0_15 = arith.constant 0 : index
    %c0_16 = arith.constant 0 : index
    %20 = vector.load %arg7[%c0_15, %c0_16] : memref<1x128xf32, #tpu.memory_space<vmem>>, vector<1x128xf32>
    %21 = vector.broadcast %20 : vector<1x128xf32> to vector<256x128xf32>
    %22 = arith.addf %19, %21 : vector<256x128xf32>
    %23 = arith.truncf %22 : vector<256x128xf32> to vector<256x128xbf16>
    %c0_17 = arith.constant 0 : index
    %c0_18 = arith.constant 0 : index
    %24 = vector.load %arg8[%c0_17, %c0_18] : memref<256x128xbf16, #tpu.memory_space<vmem>>, vector<256x128xbf16>
    tpu.vector_store %arg8[%c0_17, %c0_18], %23 {strides = array<i32>} : memref<256x128xbf16, #tpu.memory_space<vmem>>, vector<256x128xbf16>,
    return
  }
  func.func @transform_0(%arg0: i32) -> (i32, i32) {
    %c0_i32 = arith.constant 0 : i32
    %c0_i32_0 = arith.constant 0 : i32
    return %arg0, %c0_i32 : i32, i32
  }
  func.func @transform_1(%arg0: i32) -> (i32, i32) {
    %c0_i32 = arith.constant 0 : i32
    %c0_i32_0 = arith.constant 0 : i32
    %c0_i32_1 = arith.constant 0 : i32
    return %c0_i32, %c0_i32_0 : i32, i32
  }
  func.func @transform_2(%arg0: i32) -> (i32, i32) {
    %c0_i32 = arith.constant 0 : i32
    %c0_i32_0 = arith.constant 0 : i32
    %c0_i32_1 = arith.constant 0 : i32
    return %c0_i32, %c0_i32_0 : i32, i32
  }
  func.func @transform_3(%arg0: i32) -> (i32, i32) {
    %c0_i32 = arith.constant 0 : i32
    %c0_i32_0 = arith.constant 0 : i32
    %c0_i32_1 = arith.constant 0 : i32
    return %c0_i32, %c0_i32_0 : i32, i32
  }
  func.func @transform_4(%arg0: i32) -> (i32, i32) {
    %c0_i32 = arith.constant 0 : i32
    %c0_i32_0 = arith.constant 0 : i32
    %c0_i32_1 = arith.constant 0 : i32
    return %c0_i32, %c0_i32_0 : i32, i32
  }
  func.func @transform_5(%arg0: i32) -> (i32, i32) {
    %c0_i32 = arith.constant 0 : i32
    %c0_i32_0 = arith.constant 0 : i32
    %c0_i32_1 = arith.constant 0 : i32
    return %c0_i32, %c0_i32_0 : i32, i32
  }
  func.func @transform_6(%arg0: i32) -> (i32, i32) {
    %c0_i32 = arith.constant 0 : i32
    %c0_i32_0 = arith.constant 0 : i32
    %c0_i32_1 = arith.constant 0 : i32
    return %c0_i32, %c0_i32_0 : i32, i32
  }
  func.func @transform_7(%arg0: i32) -> (i32, i32) {
    %c0_i32 = arith.constant 0 : i32
    %c0_i32_0 = arith.constant 0 : i32
    return %arg0, %c0_i32 : i32, i32
  }
}

</mosaic_0001>

<llo_original>
// kernel: tpu_custom_call.1
$region0: #{tpu_custom_call.1}
  #allocation0 [shape = 'u32[]', space=smem, size = 0x4, offset = 0x4, fixed_abs, tag = 'smem constant byte address 0x4 - core index']
  #allocation1 [shape = 'u32[144,128]{1,0:T(1,128)}', space=vmem, size = 0x12000, scoped, tag = 'internal scratch']
  %s0 = inlined_call_operand.vmem [shape: f32[256,32], index: 0, kind: input, shape index: {}]
  %s1 = inlined_call_operand.vmem [shape: bf16[32,128], index: 1, kind: input, shape index: {}]
  %s2 = inlined_call_operand.vmem [shape: f32[1,128], index: 2, kind: input, shape index: {}]
  %s3 = inlined_call_operand.vmem [shape: bf16[128,128], index: 3, kind: input, shape index: {}]
  %s4 = inlined_call_operand.vmem [shape: f32[1,128], index: 4, kind: input, shape index: {}]
  %s5 = inlined_call_operand.vmem [shape: bf16[128,128], index: 5, kind: input, shape index: {}]
  %s6 = inlined_call_operand.vmem [shape: f32[1,128], index: 6, kind: input, shape index: {}]
  %s7 = inlined_call_operand.hbm [shape: bf16[256,128], index: 7, kind: output, shape index: {}]
  %s8 = sld [smem:[#allocation0]]
  $region38: #{tpu_custom_call.1} parent=0
    _
  %s10 = ssub.s32 1, %s8
  %s11 = scalar_select 0, %s10, %s8
  $region1: #{tpu_custom_call.1} parent=0
    #allocation2 [shape = 'u8[65536]{0}', space=vmem, size = 0x10000, scoped, tag = 'output window, operand 0, single buffered']
    #allocation3 [shape = 's32[1]{0}', space=sflag, size = 0x4, scoped, tag = 'scoped memory for tpu_custom_call.1']
    %12 = vsyncpa [#allocation3], 0
    // Predicated region
    $region2: #{tpu_custom_call.1} parent=1 // pred_check
      _
    $region3: #{tpu_custom_call.1} parent=1 // pred_check_branch
      %14 = sbr.rel (0) target = $region5
    $region4: #{tpu_custom_call.1} parent=1 // pred_region
      _
    $region5: #{tpu_custom_call.1} parent=1 // pred_fallthru
      _
    // Predicated region
    $region6: #{tpu_custom_call.1} parent=1 // pred_check
      _
    $region7: #{tpu_custom_call.1} parent=1 // pred_check_branch
      %16 = sbr.rel (0) target = $region9
    $region8: #{tpu_custom_call.1} parent=1 // pred_region
      _
    $region9: #{tpu_custom_call.1} parent=1 // pred_fallthru
      _
    // Predicated region
    $region10: #{tpu_custom_call.1} parent=1 // pred_check
      _
    $region11: #{tpu_custom_call.1} parent=1 // pred_check_branch
      %18 = sbr.rel (0) target = $region13
    $region12: #{tpu_custom_call.1} parent=1 // pred_region
      _
    $region13: #{tpu_custom_call.1} parent=1 // pred_fallthru
      _
    // Predicated region
    $region14: #{tpu_custom_call.1} parent=1 // pred_check
      _
    $region15: #{tpu_custom_call.1} parent=1 // pred_check_branch
      %20 = sbr.rel (0) target = $region17
    $region16: #{tpu_custom_call.1} parent=1 // pred_region
      _
    $region17: #{tpu_custom_call.1} parent=1 // pred_fallthru
      _
    // Predicated region
    $region18: #{tpu_custom_call.1} parent=1 // pred_check
      _
    $region19: #{tpu_custom_call.1} parent=1 // pred_check_branch
      %22 = sbr.rel (0) target = $region21
    $region20: #{tpu_custom_call.1} parent=1 // pred_region
      _
    $region21: #{tpu_custom_call.1} parent=1 // pred_fallthru
      _
    // Predicated region
    $region22: #{tpu_custom_call.1} parent=1 // pred_check
      _
    $region23: #{tpu_custom_call.1} parent=1 // pred_check_branch
      %24 = sbr.rel (0) target = $region25
    $region24: #{tpu_custom_call.1} parent=1 // pred_region
      _
    $region25: #{tpu_custom_call.1} parent=1 // pred_fallthru
      _
    // Predicated region
    $region26: #{tpu_custom_call.1} parent=1 // pred_check
      _
    $region27: #{tpu_custom_call.1} parent=1 // pred_check_branch
      %26 = sbr.rel (0) target = $region29
    $region28: #{tpu_custom_call.1} parent=1 // pred_region
      _
    $region29: #{tpu_custom_call.1} parent=1 // pred_fallthru
      _
    %v28 = vld [vmem:[%s0] sm:$0xff]
    %v29 = vld [vmem:[%s0 + $0x8] sm:$0xff]
    %v30 = vld [vmem:[%s0 + $0x10] sm:$0xff]
    %v31 = vld [vmem:[%s0 + $0x18] sm:$0xff]
    %v32 = vld [vmem:[%s0 + $0x20] sm:$0xff]
    %v33 = vld [vmem:[%s0 + $0x28] sm:$0xff]
    %v34 = vld [vmem:[%s0 + $0x30] sm:$0xff]
    %v35 = vld [vmem:[%s0 + $0x38] sm:$0xff]
    %v36 = vld [vmem:[%s0 + $0x40] sm:$0xff]
    %v37 = vld [vmem:[%s0 + $0x48] sm:$0xff]
    %v38 = vld [vmem:[%s0 + $0x50] sm:$0xff]
    %v39 = vld [vmem:[%s0 + $0x58] sm:$0xff]
    %v40 = vld [vmem:[%s0 + $0x60] sm:$0xff]
    %v41 = vld [vmem:[%s0 + $0x68] sm:$0xff]
    %v42 = vld [vmem:[%s0 + $0x70] sm:$0xff]
    %v43 = vld [vmem:[%s0 + $0x78] sm:$0xff]
    %v44 = vld [vmem:[%s0 + $0x80] sm:$0xff]
    %v45 = vld [vmem:[%s0 + $0x88] sm:$0xff]
    %v46 = vld [vmem:[%s0 + $0x90] sm:$0xff]
    %v47 = vld [vmem:[%s0 + $0x98] sm:$0xff]
    %v48 = vld [vmem:[%s0 + $0xa0] sm:$0xff]
    %v49 = vld [vmem:[%s0 + $0xa8] sm:$0xff]
    %v50 = vld [vmem:[%s0 + $0xb0] sm:$0xff]
    %v51 = vld [vmem:[%s0 + $0xb8] sm:$0xff]
    %v52 = vld [vmem:[%s0 + $0xc0] sm:$0xff]
    %v53 = vld [vmem:[%s0 + $0xc8] sm:$0xff]
    %v54 = vld [vmem:[%s0 + $0xd0] sm:$0xff]
    %v55 = vld [vmem:[%s0 + $0xd8] sm:$0xff]
    %v56 = vld [vmem:[%s0 + $0xe0] sm:$0xff]
    %v57 = vld [vmem:[%s0 + $0xe8] sm:$0xff]
    %v58 = vld [vmem:[%s0 + $0xf0] sm:$0xff]
    %v59 = vld [vmem:[%s0 + $0xf8] sm:$0xff]
    %v60 = vpack.c.bf16 %v29, %v28
    %v61 = vpack.c.bf16 %v31, %v30
    %v62 = vpack.c.bf16 %v33, %v32
    %v63 = vpack.c.bf16 %v35, %v34
    %v64 = vpack.c.bf16 %v37, %v36
    %v65 = vpack.c.bf16 %v39, %v38
    %v66 = vpack.c.bf16 %v41, %v40
    %v67 = vpack.c.bf16 %v43, %v42
    %v68 = vpack.c.bf16 %v45, %v44
    %v69 = vpack.c.bf16 %v47, %v46
    %v70 = vpack.c.bf16 %v49, %v48
    %v71 = vpack.c.bf16 %v51, %v50
    %v72 = vpack.c.bf16 %v53, %v52
    %v73 = vpack.c.bf16 %v55, %v54
    %v74 = vpack.c.bf16 %v57, %v56
    %v75 = vpack.c.bf16 %v59, %v58
    %v76 = vld [vmem:[%s1] sm:$0xf]
    %v77 = vld [vmem:[%s1 + $0x4] sm:$0xf]
    %v78 = vld [vmem:[%s1 + $0x8] sm:$0xf]
    %v79 = vld [vmem:[%s1 + $0xc] sm:$0xf]
    %v80 = vld [vmem:[%s2] sm:$0x1]
    %v82 = vlaneseq
    %v83 = vshrl.u32 %v82, 7
    %v84 = vsub.s32 0, %v83
    %v85 = vrot.slane %v80, %v84
    %v91 = vunpack.c.l.b16 %v76
    %v92 = vunpack.c.l.b16 %v77
    %v93 = vunpack.c.l.b16 %v78
    %v94 = vunpack.c.l.b16 %v79
    %v95 = vpack.c.b16 %v92, %v91
    %v96 = vpack.c.b16 %v94, %v93
    %vm99 = vcmask 261120
    %v101 = vsel %vm99, %v60, 0
    %v104 = vsel %vm99, %v61, 0
    %v107 = vsel %vm99, %v62, 0
    %v110 = vsel %vm99, %v63, 0
    %v113 = vsel %vm99, %v64, 0
    %v116 = vsel %vm99, %v65, 0
    %v119 = vsel %vm99, %v66, 0
    %v122 = vsel %vm99, %v67, 0
    %v125 = vsel %vm99, %v68, 0
    %v128 = vsel %vm99, %v69, 0
    %v131 = vsel %vm99, %v70, 0
    %v134 = vsel %vm99, %v71, 0
    %v137 = vsel %vm99, %v72, 0
    %v140 = vsel %vm99, %v73, 0
    %v143 = vsel %vm99, %v74, 0
    %v146 = vsel %vm99, %v75, 0
    %148 = vmatprep.subr.bf16.mxu0 0
    %149 = vmatpush1.bf16.msra.mxu0 %v95
    %150 = vmatprep.subr.bf16.mxu0 0
    %151 = vmatpush1.bf16.msra.mxu0 %v96
    %152 = vmatprep.subr.bf16.mxu0 0
    %153 = vmatpush1.bf16.msra.mxu0 0
    %154 = vmatprep.subr.bf16.mxu0 0
    %155 = vmatpush1.bf16.msra.mxu0 0
    %156 = vmatprep.subr.bf16.mxu0 0
    %157 = vmatpush1.bf16.msra.mxu0 0
    %158 = vmatprep.subr.bf16.mxu0 0
    %159 = vmatpush1.bf16.msra.mxu0 0
    %160 = vmatprep.subr.bf16.mxu0 0
    %161 = vmatpush1.bf16.msra.mxu0 0
    %162 = vmatprep.subr.bf16.mxu0 0
    %163 = vmatpush1.bf16.msra.mxu0 0
    %164 = vmatprep.subr.bf16.mxu0 0
    %165 = vmatpush1.bf16.msra.mxu0 0
    %166 = vmatprep.subr.bf16.mxu0 0
    %167 = vmatpush1.bf16.msra.mxu0 0
    %168 = vmatprep.subr.bf16.mxu0 0
    %169 = vmatpush1.bf16.msra.mxu0 0
    %170 = vmatprep.subr.bf16.mxu0 0
    %171 = vmatpush1.bf16.msra.mxu0 0
    %172 = vmatprep.subr.bf16.mxu0 0
    %173 = vmatpush1.bf16.msra.mxu0 0
    %174 = vmatprep.subr.bf16.mxu0 0
    %175 = vmatpush1.bf16.msra.mxu0 0
    %176 = vmatprep.subr.bf16.mxu0 0
    %177 = vmatpush1.bf16.msra.mxu0 0
    %178 = vmatprep.subr.bf16.mxu0 0
    %179 = vmatpush1.bf16.msra.mxu0 0
    %180 = vmatprep.mubr.bf16.mxu0 0
    %181 = vmatmul.mubr.bf16.gmra.mrb[0].mxu0 %v101
    %v182 = vpop.f32.mrb[0].mxu0
    %v183 = vadd.f32 %v85, %v182
    %v184 = vpop.f32.mrb[0].mxu0
    %v185 = vpop.f32.mrb[0].mxu0
    %v186 = vadd.f32 %v85, %v185
    %v187 = vpop.f32.mrb[0].mxu0
    %188 = vmatprep.mubr.bf16.mxu0 0
    %189 = vmatmul.mubr.bf16.gmra.mrb[0].mxu0 %v104
    %v190 = vpop.f32.mrb[0].mxu0
    %v191 = vadd.f32 %v85, %v190
    %v192 = vpop.f32.mrb[0].mxu0
    %v193 = vpop.f32.mrb[0].mxu0
    %v194 = vadd.f32 %v85, %v193
    %v195 = vpop.f32.mrb[0].mxu0
    %196 = vmatprep.mubr.bf16.mxu0 0
    %197 = vmatmul.mubr.bf16.gmra.mrb[0].mxu0 %v107
    %v198 = vpop.f32.mrb[0].mxu0
    %v199 = vadd.f32 %v85, %v198
    %v200 = vpop.f32.mrb[0].mxu0
    %v201 = vpop.f32.mrb[0].mxu0
    %v202 = vadd.f32 %v85, %v201
    %v203 = vpop.f32.mrb[0].mxu0
    %204 = vmatprep.mubr.bf16.mxu0 0
    %205 = vmatmul.mubr.bf16.gmra.mrb[0].mxu0 %v110
    %v206 = vpop.f32.mrb[0].mxu0
    %v207 = vadd.f32 %v85, %v206
    %v208 = vpop.f32.mrb[0].mxu0
    %v209 = vpop.f32.mrb[0].mxu0
    %v210 = vadd.f32 %v85, %v209
    %v211 = vpop.f32.mrb[0].mxu0
    %212 = vmatprep.mubr.bf16.mxu0 0
    %213 = vmatmul.mubr.bf16.gmra.mrb[0].mxu0 %v113
    %v214 = vpop.f32.mrb[0].mxu0
    %v215 = vadd.f32 %v85, %v214
    %v216 = vpop.f32.mrb[0].mxu0
    %v217 = vpop.f32.mrb[0].mxu0
    %v218 = vadd.f32 %v85, %v217
    %v219 = vpop.f32.mrb[0].mxu0
    %220 = vmatprep.mubr.bf16.mxu0 0
    %221 = vmatmul.mubr.bf16.gmra.mrb[0].mxu0 %v116
    %v222 = vpop.f32.mrb[0].mxu0
    %v223 = vadd.f32 %v85, %v222
    %v224 = vpop.f32.mrb[0].mxu0
    %v225 = vpop.f32.mrb[0].mxu0
    %v226 = vadd.f32 %v85, %v225
    %v227 = vpop.f32.mrb[0].mxu0
    %228 = vmatprep.mubr.bf16.mxu0 0
    %229 = vmatmul.mubr.bf16.gmra.mrb[0].mxu0 %v119
    %v230 = vpop.f32.mrb[0].mxu0
    %v231 = vadd.f32 %v85, %v230
    %v232 = vpop.f32.mrb[0].mxu0
    %v233 = vpop.f32.mrb[0].mxu0
    %v234 = vadd.f32 %v85, %v233
    %v235 = vpop.f32.mrb[0].mxu0
    %236 = vmatprep.mubr.bf16.mxu0 0
    %237 = vmatmul.mubr.bf16.gmra.mrb[0].mxu0 %v122
    %v238 = vpop.f32.mrb[0].mxu0
    %v239 = vadd.f32 %v85, %v238
    %v240 = vpop.f32.mrb[0].mxu0
    %v241 = vpop.f32.mrb[0].mxu0
    %v242 = vadd.f32 %v85, %v241
    %v243 = vpop.f32.mrb[0].mxu0
    %244 = vmatprep.mubr.bf16.mxu0 0
    %245 = vmatmul.mubr.bf16.gmra.mrb[0].mxu0 %v125
    %v246 = vpop.f32.mrb[0].mxu0
    %v247 = vadd.f32 %v85, %v246
    %v248 = vpop.f32.mrb[0].mxu0
    %v249 = vpop.f32.mrb[0].mxu0
    %v250 = vadd.f32 %v85, %v249
    %v251 = vpop.f32.mrb[0].mxu0
    %252 = vmatprep.mubr.bf16.mxu0 0
    %253 = vmatmul.mubr.bf16.gmra.mrb[0].mxu0 %v128
    %v254 = vpop.f32.mrb[0].mxu0
    %v255 = vadd.f32 %v85, %v254
    %v256 = vpop.f32.mrb[0].mxu0
    %v257 = vpop.f32.mrb[0].mxu0
    %v258 = vadd.f32 %v85, %v257
    %v259 = vpop.f32.mrb[0].mxu0
    %260 = vmatprep.mubr.bf16.mxu0 0
    %261 = vmatmul.mubr.bf16.gmra.mrb[0].mxu0 %v131
    %v262 = vpop.f32.mrb[0].mxu0
    %v263 = vadd.f32 %v85, %v262
    %v264 = vpop.f32.mrb[0].mxu0
    %v265 = vpop.f32.mrb[0].mxu0
    %v266 = vadd.f32 %v85, %v265
    %v267 = vpop.f32.mrb[0].mxu0
    %268 = vmatprep.mubr.bf16.mxu0 0
    %269 = vmatmul.mubr.bf16.gmra.mrb[0].mxu0 %v134
    %v270 = vpop.f32.mrb[0].mxu0
    %v271 = vadd.f32 %v85, %v270
    %v272 = vpop.f32.mrb[0].mxu0
    %v273 = vpop.f32.mrb[0].mxu0
    %v274 = vadd.f32 %v85, %v273
    %v275 = vpop.f32.mrb[0].mxu0
    %276 = vmatprep.mubr.bf16.mxu0 0
    %277 = vmatmul.mubr.bf16.gmra.mrb[0].mxu0 %v137
    %v278 = vpop.f32.mrb[0].mxu0
    %v279 = vadd.f32 %v85, %v278
    %v280 = vpop.f32.mrb[0].mxu0
    %v281 = vpop.f32.mrb[0].mxu0
    %v282 = vadd.f32 %v85, %v281
    %v283 = vpop.f32.mrb[0].mxu0
    %284 = vmatprep.mubr.bf16.mxu0 0
    %285 = vmatmul.mubr.bf16.gmra.mrb[0].mxu0 %v140
    %v286 = vpop.f32.mrb[0].mxu0
    %v287 = vadd.f32 %v85, %v286
    %v288 = vpop.f32.mrb[0].mxu0
    %v289 = vpop.f32.mrb[0].mxu0
    %v290 = vadd.f32 %v85, %v289
    %v291 = vpop.f32.mrb[0].mxu0
    %292 = vmatprep.mubr.bf16.mxu0 0
    %293 = vmatmul.mubr.bf16.gmra.mrb[0].mxu0 %v143
    %v294 = vpop.f32.mrb[0].mxu0
    %v295 = vadd.f32 %v85, %v294
    %v296 = vpop.f32.mrb[0].mxu0
    %v297 = vpop.f32.mrb[0].mxu0
    %v298 = vadd.f32 %v85, %v297
    %v299 = vpop.f32.mrb[0].mxu0
    %300 = vmatprep.mubr.bf16.mxu0 0
    %301 = vmatmul.mubr.bf16.gmra.mrb[0].mxu0 %v146
    %v302 = vpop.f32.mrb[0].mxu0
    %v303 = vadd.f32 %v85, %v302
    %v304 = vpop.f32.mrb[0].mxu0
    %v305 = vpop.f32.mrb[0].mxu0
    %v306 = vadd.f32 %v85, %v305
    %v307 = vpop.f32.mrb[0].mxu0
    %308 = vdwg.mxu0
    %v309 = vmax.f32 %v183, 0.0
    %v310 = vmax.f32 %v186, 0.0
    %v311 = vmax.f32 %v191, 0.0
    %v312 = vmax.f32 %v194, 0.0
    %v313 = vmax.f32 %v199, 0.0
    %v314 = vmax.f32 %v202, 0.0
    %v315 = vmax.f32 %v207, 0.0
    %v316 = vmax.f32 %v210, 0.0
    %v317 = vmax.f32 %v215, 0.0
    %v318 = vmax.f32 %v218, 0.0
    %v319 = vmax.f32 %v223, 0.0
    %v320 = vmax.f32 %v226, 0.0
    %v321 = vmax.f32 %v231, 0.0
    %v322 = vmax.f32 %v234, 0.0
    %v323 = vmax.f32 %v239, 0.0
    %v324 = vmax.f32 %v242, 0.0
    %v325 = vmax.f32 %v247, 0.0
    %v326 = vmax.f32 %v250, 0.0
    %v327 = vmax.f32 %v255, 0.0
    %v328 = vmax.f32 %v258, 0.0
    %v329 = vmax.f32 %v263, 0.0
    %v330 = vmax.f32 %v266, 0.0
    %v331 = vmax.f32 %v271, 0.0
    %v332 = vmax.f32 %v274, 0.0
    %v333 = vmax.f32 %v279, 0.0
    %v334 = vmax.f32 %v282, 0.0
    %v335 = vmax.f32 %v287, 0.0
    %v336 = vmax.f32 %v290, 0.0
    %v337 = vmax.f32 %v295, 0.0
    %v338 = vmax.f32 %v298, 0.0
    %v339 = vmax.f32 %v303, 0.0
    %v340 = vmax.f32 %v306, 0.0
    %v341 = vpack.c.bf16 %v310, %v309
    %v342 = vpack.c.bf16 %v312, %v311
    %v343 = vpack.c.bf16 %v314, %v313
    %v344 = vpack.c.bf16 %v316, %v315
    %v345 = vpack.c.bf16 %v318, %v317
    %v346 = vpack.c.bf16 %v320, %v319
    %v347 = vpack.c.bf16 %v322, %v321
    %v348 = vpack.c.bf16 %v324, %v323
    %v349 = vpack.c.bf16 %v326, %v325
    %v350 = vpack.c.bf16 %v328, %v327
    %v351 = vpack.c.bf16 %v330, %v329
    %v352 = vpack.c.bf16 %v332, %v331
    %v353 = vpack.c.bf16 %v334, %v333
    %v354 = vpack.c.bf16 %v336, %v335
    %v355 = vpack.c.bf16 %v338, %v337
    %v356 = vpack.c.bf16 %v340, %v339
    %v357 = vld [vmem:[%s3] sm:$0xf]
    %v358 = vld [vmem:[%s3 + $0x4] sm:$0xf]
    %v359 = vld [vmem:[%s3 + $0x8] sm:$0xf]
    %v360 = vld [vmem:[%s3 + $0xc] sm:$0xf]
    %v361 = vld [vmem:[%s3 + $0x10] sm:$0xf]
    %v362 = vld [vmem:[%s3 + $0x14] sm:$0xf]
    %v363 = vld [vmem:[%s3 + $0x18] sm:$0xf]
    %v364 = vld [vmem:[%s3 + $0x1c] sm:$0xf]
    %v365 = vld [vmem:[%s3 + $0x20] sm:$0xf]
    %v366 = vld [vmem:[%s3 + $0x24] sm:$0xf]
    %v367 = vld [vmem:[%s3 + $0x28] sm:$0xf]
    %v368 = vld [vmem:[%s3 + $0x2c] sm:$0xf]
    %v369 = vld [vmem:[%s3 + $0x30] sm:$0xf]
    %v370 = vld [vmem:[%s3 + $0x34] sm:$0xf]
    %v371 = vld [vmem:[%s3 + $0x38] sm:$0xf]
    %v372 = vld [vmem:[%s3 + $0x3c] sm:$0xf]
    %v373 = vld [vmem:[%s4] sm:$0x1]
    %v375 = vlaneseq
    %v376 = vshrl.u32 %v375, 7
    %v377 = vsub.s32 0, %v376
    %v378 = vrot.slane %v373, %v377
    %v396 = vunpack.c.l.b16 %v357
    %v397 = vunpack.c.l.b16 %v358
    %v398 = vunpack.c.l.b16 %v359
    %v399 = vunpack.c.l.b16 %v360
    %v400 = vunpack.c.l.b16 %v361
    %v401 = vunpack.c.l.b16 %v362
    %v402 = vunpack.c.l.b16 %v363
    %v403 = vunpack.c.l.b16 %v364
    %v404 = vunpack.c.l.b16 %v365
    %v405 = vunpack.c.l.b16 %v366
    %v406 = vunpack.c.l.b16 %v367
    %v407 = vunpack.c.l.b16 %v368
    %v408 = vunpack.c.l.b16 %v369
    %v409 = vunpack.c.l.b16 %v370
    %v410 = vunpack.c.l.b16 %v371
    %v411 = vunpack.c.l.b16 %v372
    %v412 = vpack.c.b16 %v397, %v396
    %v413 = vpack.c.b16 %v399, %v398
    %v414 = vpack.c.b16 %v401, %v400
    %v415 = vpack.c.b16 %v403, %v402
    %v416 = vpack.c.b16 %v405, %v404
    %v417 = vpack.c.b16 %v407, %v406
    %v418 = vpack.c.b16 %v409, %v408
    %v419 = vpack.c.b16 %v411, %v410
    %428 = vmatprep.subr.bf16.mxu0 0
    %429 = vmatpush1.bf16.msra.mxu0 %v412
    %430 = vmatprep.subr.bf16.mxu0 0
    %431 = vmatpush1.bf16.msra.mxu0 %v413
    %432 = vmatprep.subr.bf16.mxu0 0
    %433 = vmatpush1.bf16.msra.mxu0 %v414
    %434 = vmatprep.subr.bf16.mxu0 0
    %435 = vmatpush1.bf16.msra.mxu0 %v415
    %436 = vmatprep.subr.bf16.mxu0 0
    %437 = vmatpush1.bf16.msra.mxu0 %v416
    %438 = vmatprep.subr.bf16.mxu0 0
    %439 = vmatpush1.bf16.msra.mxu0 %v417
    %440 = vmatprep.subr.bf16.mxu0 0
    %441 = vmatpush1.bf16.msra.mxu0 %v418
    %442 = vmatprep.subr.bf16.mxu0 0
    %443 = vmatpush1.bf16.msra.mxu0 %v419
    %444 = vmatprep.subr.bf16.mxu0 0
    %445 = vmatpush1.bf16.msra.mxu0 0
    %446 = vmatprep.subr.bf16.mxu0 0
    %447 = vmatpush1.bf16.msra.mxu0 0
    %448 = vmatprep.subr.bf16.mxu0 0
    %449 = vmatpush1.bf16.msra.mxu0 0
    %450 = vmatprep.subr.bf16.mxu0 0
    %451 = vmatpush1.bf16.msra.mxu0 0
    %452 = vmatprep.subr.bf16.mxu0 0
    %453 = vmatpush1.bf16.msra.mxu0 0
    %454 = vmatprep.subr.bf16.mxu0 0
    %455 = vmatpush1.bf16.msra.mxu0 0
    %456 = vmatprep.subr.bf16.mxu0 0
    %457 = vmatpush1.bf16.msra.mxu0 0
    %458 = vmatprep.subr.bf16.mxu0 0
    %459 = vmatpush1.bf16.msra.mxu0 0
    %460 = vmatprep.mubr.bf16.mxu0 0
    %461 = vmatmul.mubr.bf16.gmra.mrb[0].mxu0 %v341
    %v462 = vpop.f32.mrb[0].mxu0
    %v463 = vadd.f32 %v378, %v462
    %v464 = vpop.f32.mrb[0].mxu0
    %v465 = vpop.f32.mrb[0].mxu0
    %v466 = vadd.f32 %v378, %v465
    %v467 = vpop.f32.mrb[0].mxu0
    %468 = vmatprep.mubr.bf16.mxu0 0
    %469 = vmatmul.mubr.bf16.gmra.mrb[0].mxu0 %v342
    %v470 = vpop.f32.mrb[0].mxu0
    %v471 = vadd.f32 %v378, %v470
    %v472 = vpop.f32.mrb[0].mxu0
    %v473 = vpop.f32.mrb[0].mxu0
    %v474 = vadd.f32 %v378, %v473
    %v475 = vpop.f32.mrb[0].mxu0
    %476 = vmatprep.mubr.bf16.mxu0 0
    %477 = vmatmul.mubr.bf16.gmra.mrb[0].mxu0 %v343
    %v478 = vpop.f32.mrb[0].mxu0
    %v479 = vadd.f32 %v378, %v478
    %v480 = vpop.f32.mrb[0].mxu0
    %v481 = vpop.f32.mrb[0].mxu0
    %v482 = vadd.f32 %v378, %v481
    %v483 = vpop.f32.mrb[0].mxu0
    %484 = vmatprep.mubr.bf16.mxu0 0
    %485 = vmatmul.mubr.bf16.gmra.mrb[0].mxu0 %v344
    %v486 = vpop.f32.mrb[0].mxu0
    %v487 = vadd.f32 %v378, %v486
    %v488 = vpop.f32.mrb[0].mxu0
    %v489 = vpop.f32.mrb[0].mxu0
    %v490 = vadd.f32 %v378, %v489
    %v491 = vpop.f32.mrb[0].mxu0
    %492 = vmatprep.mubr.bf16.mxu0 0
    %493 = vmatmul.mubr.bf16.gmra.mrb[0].mxu0 %v345
    %v494 = vpop.f32.mrb[0].mxu0
    %v495 = vadd.f32 %v378, %v494
    %v496 = vpop.f32.mrb[0].mxu0
    %v497 = vpop.f32.mrb[0].mxu0
    %v498 = vadd.f32 %v378, %v497
    %v499 = vpop.f32.mrb[0].mxu0
    %500 = vmatprep.mubr.bf16.mxu0 0
    %501 = vmatmul.mubr.bf16.gmra.mrb[0].mxu0 %v346
    %v502 = vpop.f32.mrb[0].mxu0
    %v503 = vadd.f32 %v378, %v502
    %v504 = vpop.f32.mrb[0].mxu0
    %v505 = vpop.f32.mrb[0].mxu0
    %v506 = vadd.f32 %v378, %v505
    %v507 = vpop.f32.mrb[0].mxu0
    %508 = vmatprep.mubr.bf16.mxu0 0
    %509 = vmatmul.mubr.bf16.gmra.mrb[0].mxu0 %v347
    %v510 = vpop.f32.mrb[0].mxu0
    %v511 = vadd.f32 %v378, %v510
    %v512 = vpop.f32.mrb[0].mxu0
    %v513 = vpop.f32.mrb[0].mxu0
    %v514 = vadd.f32 %v378, %v513
    %v515 = vpop.f32.mrb[0].mxu0
    %516 = vmatprep.mubr.bf16.mxu0 0
    %517 = vmatmul.mubr.bf16.gmra.mrb[0].mxu0 %v348
    %v518 = vpop.f32.mrb[0].mxu0
    %v519 = vadd.f32 %v378, %v518
    %v520 = vpop.f32.mrb[0].mxu0
    %v521 = vpop.f32.mrb[0].mxu0
    %v522 = vadd.f32 %v378, %v521
    %v523 = vpop.f32.mrb[0].mxu0
    %524 = vmatprep.mubr.bf16.mxu0 0
    %525 = vmatmul.mubr.bf16.gmra.mrb[0].mxu0 %v349
    %v526 = vpop.f32.mrb[0].mxu0
    %v527 = vadd.f32 %v378, %v526
    %v528 = vpop.f32.mrb[0].mxu0
    %v529 = vpop.f32.mrb[0].mxu0
    %v530 = vadd.f32 %v378, %v529
    %v531 = vpop.f32.mrb[0].mxu0
    %532 = vmatprep.mubr.bf16.mxu0 0
    %533 = vmatmul.mubr.bf16.gmra.mrb[0].mxu0 %v350
    %v534 = vpop.f32.mrb[0].mxu0
    %v535 = vadd.f32 %v378, %v534
    %v536 = vpop.f32.mrb[0].mxu0
    %v537 = vpop.f32.mrb[0].mxu0
    %v538 = vadd.f32 %v378, %v537
    %v539 = vpop.f32.mrb[0].mxu0
    %540 = vmatprep.mubr.bf16.mxu0 0
    %541 = vmatmul.mubr.bf16.gmra.mrb[0].mxu0 %v351
    %v542 = vpop.f32.mrb[0].mxu0
    %v543 = vadd.f32 %v378, %v542
    %v544 = vpop.f32.mrb[0].mxu0
    %v545 = vpop.f32.mrb[0].mxu0
    %v546 = vadd.f32 %v378, %v545
    %v547 = vpop.f32.mrb[0].mxu0
    %548 = vmatprep.mubr.bf16.mxu0 0
    %549 = vmatmul.mubr.bf16.gmra.mrb[0].mxu0 %v352
    %v550 = vpop.f32.mrb[0].mxu0
    %v551 = vadd.f32 %v378, %v550
    %v552 = vpop.f32.mrb[0].mxu0
    %v553 = vpop.f32.mrb[0].mxu0
    %v554 = vadd.f32 %v378, %v553
    %v555 = vpop.f32.mrb[0].mxu0
    %556 = vmatprep.mubr.bf16.mxu0 0
    %557 = vmatmul.mubr.bf16.gmra.mrb[0].mxu0 %v353
    %v558 = vpop.f32.mrb[0].mxu0
    %v559 = vadd.f32 %v378, %v558
    %v560 = vpop.f32.mrb[0].mxu0
    %v561 = vpop.f32.mrb[0].mxu0
    %v562 = vadd.f32 %v378, %v561
    %v563 = vpop.f32.mrb[0].mxu0
    %564 = vmatprep.mubr.bf16.mxu0 0
    %565 = vmatmul.mubr.bf16.gmra.mrb[0].mxu0 %v354
    %v566 = vpop.f32.mrb[0].mxu0
    %v567 = vadd.f32 %v378, %v566
    %v568 = vpop.f32.mrb[0].mxu0
    %v569 = vpop.f32.mrb[0].mxu0
    %v570 = vadd.f32 %v378, %v569
    %v571 = vpop.f32.mrb[0].mxu0
    %572 = vmatprep.mubr.bf16.mxu0 0
    %573 = vmatmul.mubr.bf16.gmra.mrb[0].mxu0 %v355
    %v574 = vpop.f32.mrb[0].mxu0
    %v575 = vadd.f32 %v378, %v574
    %v576 = vpop.f32.mrb[0].mxu0
    %v577 = vpop.f32.mrb[0].mxu0
    %v578 = vadd.f32 %v378, %v577
    %v579 = vpop.f32.mrb[0].mxu0
    %580 = vmatprep.mubr.bf16.mxu0 0
    %581 = vmatmul.mubr.bf16.gmra.mrb[0].mxu0 %v356
    %v582 = vpop.f32.mrb[0].mxu0
    %v583 = vadd.f32 %v378, %v582
    %v584 = vpop.f32.mrb[0].mxu0
    %v585 = vpop.f32.mrb[0].mxu0
    %v586 = vadd.f32 %v378, %v585
    %v587 = vpop.f32.mrb[0].mxu0
    %588 = vdwg.mxu0
    %v589 = vmax.f32 %v463, 0.0
    %v590 = vmax.f32 %v466, 0.0
    %v591 = vmax.f32 %v471, 0.0
    %v592 = vmax.f32 %v474, 0.0
    %v593 = vmax.f32 %v479, 0.0
    %v594 = vmax.f32 %v482, 0.0
    %v595 = vmax.f32 %v487, 0.0
    %v596 = vmax.f32 %v490, 0.0
    %v597 = vmax.f32 %v495, 0.0
    %v598 = vmax.f32 %v498, 0.0
    %v599 = vmax.f32 %v503, 0.0
    %v600 = vmax.f32 %v506, 0.0
    %v601 = vmax.f32 %v511, 0.0
    %v602 = vmax.f32 %v514, 0.0
    %v603 = vmax.f32 %v519, 0.0
    %v604 = vmax.f32 %v522, 0.0
    %v605 = vmax.f32 %v527, 0.0
    %v606 = vmax.f32 %v530, 0.0
    %v607 = vmax.f32 %v535, 0.0
    %v608 = vmax.f32 %v538, 0.0
    %v609 = vmax.f32 %v543, 0.0
    %v610 = vmax.f32 %v546, 0.0
    %v611 = vmax.f32 %v551, 0.0
    %v612 = vmax.f32 %v554, 0.0
    %v613 = vmax.f32 %v559, 0.0
    %v614 = vmax.f32 %v562, 0.0
    %v615 = vmax.f32 %v567, 0.0
    %v616 = vmax.f32 %v570, 0.0
    %v617 = vmax.f32 %v575, 0.0
    %v618 = vmax.f32 %v578, 0.0
    %v619 = vmax.f32 %v583, 0.0
    %v620 = vmax.f32 %v586, 0.0
    %v621 = vpack.c.bf16 %v590, %v589
    %v622 = vpack.c.bf16 %v592, %v591
    %v623 = vpack.c.bf16 %v594, %v593
    %v624 = vpack.c.bf16 %v596, %v595
    %v625 = vpack.c.bf16 %v598, %v597
    %v626 = vpack.c.bf16 %v600, %v599
    %v627 = vpack.c.bf16 %v602, %v601
    %v628 = vpack.c.bf16 %v604, %v603
    %v629 = vpack.c.bf16 %v606, %v605
    %v630 = vpack.c.bf16 %v608, %v607
    %v631 = vpack.c.bf16 %v610, %v609
    %v632 = vpack.c.bf16 %v612, %v611
    %v633 = vpack.c.bf16 %v614, %v613
    %v634 = vpack.c.bf16 %v616, %v615
    %v635 = vpack.c.bf16 %v618, %v617
    %v636 = vpack.c.bf16 %v620, %v619
    %v637 = vld [vmem:[%s5] sm:$0xf]
    %v638 = vld [vmem:[%s5 + $0x4] sm:$0xf]
    %v639 = vld [vmem:[%s5 + $0x8] sm:$0xf]
    %v640 = vld [vmem:[%s5 + $0xc] sm:$0xf]
    %v641 = vld [vmem:[%s5 + $0x10] sm:$0xf]
    %v642 = vld [vmem:[%s5 + $0x14] sm:$0xf]
    %v643 = vld [vmem:[%s5 + $0x18] sm:$0xf]
    %v644 = vld [vmem:[%s5 + $0x1c] sm:$0xf]
    %v645 = vld [vmem:[%s5 + $0x20] sm:$0xf]
    %v646 = vld [vmem:[%s5 + $0x24] sm:$0xf]
    %v647 = vld [vmem:[%s5 + $0x28] sm:$0xf]
    %v648 = vld [vmem:[%s5 + $0x2c] sm:$0xf]
    %v649 = vld [vmem:[%s5 + $0x30] sm:$0xf]
    %v650 = vld [vmem:[%s5 + $0x34] sm:$0xf]
    %v651 = vld [vmem:[%s5 + $0x38] sm:$0xf]
    %v652 = vld [vmem:[%s5 + $0x3c] sm:$0xf]
    %v653 = vld [vmem:[%s6] sm:$0x1]
    %v655 = vlaneseq
    %v656 = vshrl.u32 %v655, 7
    %v657 = vsub.s32 0, %v656
    %v658 = vrot.slane %v653, %v657
    %v676 = vunpack.c.l.b16 %v637
    %v677 = vunpack.c.l.b16 %v638
    %v678 = vunpack.c.l.b16 %v639
    %v679 = vunpack.c.l.b16 %v640
    %v680 = vunpack.c.l.b16 %v641
    %v681 = vunpack.c.l.b16 %v642
    %v682 = vunpack.c.l.b16 %v643
    %v683 = vunpack.c.l.b16 %v644
    %v684 = vunpack.c.l.b16 %v645
    %v685 = vunpack.c.l.b16 %v646
    %v686 = vunpack.c.l.b16 %v647
    %v687 = vunpack.c.l.b16 %v648
    %v688 = vunpack.c.l.b16 %v649
    %v689 = vunpack.c.l.b16 %v650
    %v690 = vunpack.c.l.b16 %v651
    %v691 = vunpack.c.l.b16 %v652
    %v692 = vpack.c.b16 %v677, %v676
    %v693 = vpack.c.b16 %v679, %v678
    %v694 = vpack.c.b16 %v681, %v680
    %v695 = vpack.c.b16 %v683, %v682
    %v696 = vpack.c.b16 %v685, %v684
    %v697 = vpack.c.b16 %v687, %v686
    %v698 = vpack.c.b16 %v689, %v688
    %v699 = vpack.c.b16 %v691, %v690
    %708 = vmatprep.subr.bf16.mxu0 0
    %709 = vmatpush1.bf16.msra.mxu0 %v692
    %710 = vmatprep.subr.bf16.mxu0 0
    %711 = vmatpush1.bf16.msra.mxu0 %v693
    %712 = vmatprep.subr.bf16.mxu0 0
    %713 = vmatpush1.bf16.msra.mxu0 %v694
    %714 = vmatprep.subr.bf16.mxu0 0
    %715 = vmatpush1.bf16.msra.mxu0 %v695
    %716 = vmatprep.subr.bf16.mxu0 0
    %717 = vmatpush1.bf16.msra.mxu0 %v696
    %718 = vmatprep.subr.bf16.mxu0 0
    %719 = vmatpush1.bf16.msra.mxu0 %v697
    %720 = vmatprep.subr.bf16.mxu0 0
    %721 = vmatpush1.bf16.msra.mxu0 %v698
    %722 = vmatprep.subr.bf16.mxu0 0
    %723 = vmatpush1.bf16.msra.mxu0 %v699
    %724 = vmatprep.subr.bf16.mxu0 0
    %725 = vmatpush1.bf16.msra.mxu0 0
    %726 = vmatprep.subr.bf16.mxu0 0
    %727 = vmatpush1.bf16.msra.mxu0 0
    %728 = vmatprep.subr.bf16.mxu0 0
    %729 = vmatpush1.bf16.msra.mxu0 0
    %730 = vmatprep.subr.bf16.mxu0 0
    %731 = vmatpush1.bf16.msra.mxu0 0
    %732 = vmatprep.subr.bf16.mxu0 0
    %733 = vmatpush1.bf16.msra.mxu0 0
    %734 = vmatprep.subr.bf16.mxu0 0
    %735 = vmatpush1.bf16.msra.mxu0 0
    %736 = vmatprep.subr.bf16.mxu0 0
    %737 = vmatpush1.bf16.msra.mxu0 0
    %738 = vmatprep.subr.bf16.mxu0 0
    %739 = vmatpush1.bf16.msra.mxu0 0
    %740 = vmatprep.mubr.bf16.mxu0 0
    %741 = vmatmul.mubr.bf16.gmra.mrb[0].mxu0 %v621
    %v742 = vpop.f32.mrb[0].mxu0
    %v743 = vadd.f32 %v658, %v742
    %v744 = vpop.f32.mrb[0].mxu0
    %v745 = vpop.f32.mrb[0].mxu0
    %v746 = vadd.f32 %v658, %v745
    %v747 = vpop.f32.mrb[0].mxu0
    %748 = vmatprep.mubr.bf16.mxu0 0
    %749 = vmatmul.mubr.bf16.gmra.mrb[0].mxu0 %v622
    %v750 = vpop.f32.mrb[0].mxu0
    %v751 = vadd.f32 %v658, %v750
    %v752 = vpop.f32.mrb[0].mxu0
    %v753 = vpop.f32.mrb[0].mxu0
    %v754 = vadd.f32 %v658, %v753
    %v755 = vpop.f32.mrb[0].mxu0
    %756 = vmatprep.mubr.bf16.mxu0 0
    %757 = vmatmul.mubr.bf16.gmra.mrb[0].mxu0 %v623
    %v758 = vpop.f32.mrb[0].mxu0
    %v759 = vadd.f32 %v658, %v758
    %v760 = vpop.f32.mrb[0].mxu0
    %v761 = vpop.f32.mrb[0].mxu0
    %v762 = vadd.f32 %v658, %v761
    %v763 = vpop.f32.mrb[0].mxu0
    %764 = vmatprep.mubr.bf16.mxu0 0
    %765 = vmatmul.mubr.bf16.gmra.mrb[0].mxu0 %v624
    %v766 = vpop.f32.mrb[0].mxu0
    %v767 = vadd.f32 %v658, %v766
    %v768 = vpop.f32.mrb[0].mxu0
    %v769 = vpop.f32.mrb[0].mxu0
    %v770 = vadd.f32 %v658, %v769
    %v771 = vpop.f32.mrb[0].mxu0
    %772 = vmatprep.mubr.bf16.mxu0 0
    %773 = vmatmul.mubr.bf16.gmra.mrb[0].mxu0 %v625
    %v774 = vpop.f32.mrb[0].mxu0
    %v775 = vadd.f32 %v658, %v774
    %v776 = vpop.f32.mrb[0].mxu0
    %v777 = vpop.f32.mrb[0].mxu0
    %v778 = vadd.f32 %v658, %v777
    %v779 = vpop.f32.mrb[0].mxu0
    %780 = vmatprep.mubr.bf16.mxu0 0
    %781 = vmatmul.mubr.bf16.gmra.mrb[0].mxu0 %v626
    %v782 = vpop.f32.mrb[0].mxu0
    %v783 = vadd.f32 %v658, %v782
    %v784 = vpop.f32.mrb[0].mxu0
    %v785 = vpop.f32.mrb[0].mxu0
    %v786 = vadd.f32 %v658, %v785
    %v787 = vpop.f32.mrb[0].mxu0
    %788 = vmatprep.mubr.bf16.mxu0 0
    %789 = vmatmul.mubr.bf16.gmra.mrb[0].mxu0 %v627
    %v790 = vpop.f32.mrb[0].mxu0
    %v791 = vadd.f32 %v658, %v790
    %v792 = vpop.f32.mrb[0].mxu0
    %v793 = vpop.f32.mrb[0].mxu0
    %v794 = vadd.f32 %v658, %v793
    %v795 = vpop.f32.mrb[0].mxu0
    %796 = vmatprep.mubr.bf16.mxu0 0
    %797 = vmatmul.mubr.bf16.gmra.mrb[0].mxu0 %v628
    %v798 = vpop.f32.mrb[0].mxu0
    %v799 = vadd.f32 %v658, %v798
    %v800 = vpop.f32.mrb[0].mxu0
    %v801 = vpop.f32.mrb[0].mxu0
    %v802 = vadd.f32 %v658, %v801
    %v803 = vpop.f32.mrb[0].mxu0
    %804 = vmatprep.mubr.bf16.mxu0 0
    %805 = vmatmul.mubr.bf16.gmra.mrb[0].mxu0 %v629
    %v806 = vpop.f32.mrb[0].mxu0
    %v807 = vadd.f32 %v658, %v806
    %v808 = vpop.f32.mrb[0].mxu0
    %v809 = vpop.f32.mrb[0].mxu0
    %v810 = vadd.f32 %v658, %v809
    %v811 = vpop.f32.mrb[0].mxu0
    %812 = vmatprep.mubr.bf16.mxu0 0
    %813 = vmatmul.mubr.bf16.gmra.mrb[0].mxu0 %v630
    %v814 = vpop.f32.mrb[0].mxu0
    %v815 = vadd.f32 %v658, %v814
    %v816 = vpop.f32.mrb[0].mxu0
    %v817 = vpop.f32.mrb[0].mxu0
    %v818 = vadd.f32 %v658, %v817
    %v819 = vpop.f32.mrb[0].mxu0
    %820 = vmatprep.mubr.bf16.mxu0 0
    %821 = vmatmul.mubr.bf16.gmra.mrb[0].mxu0 %v631
    %v822 = vpop.f32.mrb[0].mxu0
    %v823 = vadd.f32 %v658, %v822
    %v824 = vpop.f32.mrb[0].mxu0
    %v825 = vpop.f32.mrb[0].mxu0
    %v826 = vadd.f32 %v658, %v825
    %v827 = vpop.f32.mrb[0].mxu0
    %828 = vmatprep.mubr.bf16.mxu0 0
    %829 = vmatmul.mubr.bf16.gmra.mrb[0].mxu0 %v632
    %v830 = vpop.f32.mrb[0].mxu0
    %v831 = vadd.f32 %v658, %v830
    %v832 = vpop.f32.mrb[0].mxu0
    %v833 = vpop.f32.mrb[0].mxu0
    %v834 = vadd.f32 %v658, %v833
    %v835 = vpop.f32.mrb[0].mxu0
    %836 = vmatprep.mubr.bf16.mxu0 0
    %837 = vmatmul.mubr.bf16.gmra.mrb[0].mxu0 %v633
    %v838 = vpop.f32.mrb[0].mxu0
    %v839 = vadd.f32 %v658, %v838
    %v840 = vpop.f32.mrb[0].mxu0
    %v841 = vpop.f32.mrb[0].mxu0
    %v842 = vadd.f32 %v658, %v841
    %v843 = vpop.f32.mrb[0].mxu0
    %844 = vmatprep.mubr.bf16.mxu0 0
    %845 = vmatmul.mubr.bf16.gmra.mrb[0].mxu0 %v634
    %v846 = vpop.f32.mrb[0].mxu0
    %v847 = vadd.f32 %v658, %v846
    %v848 = vpop.f32.mrb[0].mxu0
    %v849 = vpop.f32.mrb[0].mxu0
    %v850 = vadd.f32 %v658, %v849
    %v851 = vpop.f32.mrb[0].mxu0
    %852 = vmatprep.mubr.bf16.mxu0 0
    %853 = vmatmul.mubr.bf16.gmra.mrb[0].mxu0 %v635
    %v854 = vpop.f32.mrb[0].mxu0
    %v855 = vadd.f32 %v658, %v854
    %v856 = vpop.f32.mrb[0].mxu0
    %v857 = vpop.f32.mrb[0].mxu0
    %v858 = vadd.f32 %v658, %v857
    %v859 = vpop.f32.mrb[0].mxu0
    %860 = vmatprep.mubr.bf16.mxu0 0
    %861 = vmatmul.mubr.bf16.gmra.mrb[0].mxu0 %v636
    %v862 = vpop.f32.mrb[0].mxu0
    %v863 = vadd.f32 %v658, %v862
    %v864 = vpop.f32.mrb[0].mxu0
    %v865 = vpop.f32.mrb[0].mxu0
    %v866 = vadd.f32 %v658, %v865
    %v867 = vpop.f32.mrb[0].mxu0
    %868 = vdwg.mxu0
    %v869 = vpack.c.bf16 %v746, %v743
    %v870 = vpack.c.bf16 %v754, %v751
    %v871 = vpack.c.bf16 %v762, %v759
    %v872 = vpack.c.bf16 %v770, %v767
    %v873 = vpack.c.bf16 %v778, %v775
    %v874 = vpack.c.bf16 %v786, %v783
    %v875 = vpack.c.bf16 %v794, %v791
    %v876 = vpack.c.bf16 %v802, %v799
    %v877 = vpack.c.bf16 %v810, %v807
    %v878 = vpack.c.bf16 %v818, %v815
    %v879 = vpack.c.bf16 %v826, %v823
    %v880 = vpack.c.bf16 %v834, %v831
    %v881 = vpack.c.bf16 %v842, %v839
    %v882 = vpack.c.bf16 %v850, %v847
    %v883 = vpack.c.bf16 %v858, %v855
    %v884 = vpack.c.bf16 %v866, %v863
    %v901 = vunpack.c.l.b16 %v869
    %v902 = vunpack.c.h.b16 %v869
    %v903 = vunpack.c.l.b16 %v870
    %v904 = vunpack.c.h.b16 %v870
    %v905 = vunpack.c.l.b16 %v871
    %v906 = vunpack.c.h.b16 %v871
    %v907 = vunpack.c.l.b16 %v872
    %v908 = vunpack.c.h.b16 %v872
    %v909 = vunpack.c.l.b16 %v873
    %v910 = vunpack.c.h.b16 %v873
    %v911 = vunpack.c.l.b16 %v874
    %v912 = vunpack.c.h.b16 %v874
    %v913 = vunpack.c.l.b16 %v875
    %v914 = vunpack.c.h.b16 %v875
    %v915 = vunpack.c.l.b16 %v876
    %v916 = vunpack.c.h.b16 %v876
    %v917 = vunpack.c.l.b16 %v877
    %v918 = vunpack.c.h.b16 %v877
    %v919 = vunpack.c.l.b16 %v878
    %v920 = vunpack.c.h.b16 %v878
    %v921 = vunpack.c.l.b16 %v879
    %v922 = vunpack.c.h.b16 %v879
    %v923 = vunpack.c.l.b16 %v880
    %v924 = vunpack.c.h.b16 %v880
    %v925 = vunpack.c.l.b16 %v881
    %v926 = vunpack.c.h.b16 %v881
    %v927 = vunpack.c.l.b16 %v882
    %v928 = vunpack.c.h.b16 %v882
    %v929 = vunpack.c.l.b16 %v883
    %v930 = vunpack.c.h.b16 %v883
    %v931 = vunpack.c.l.b16 %v884
    %v932 = vunpack.c.h.b16 %v884
    %v933 = vpack.c.b16 %v901, %v901
    %v934 = vpack.c.b16 %v902, %v902
    %v935 = vpack.c.b16 %v903, %v903
    %v936 = vpack.c.b16 %v904, %v904
    %v937 = vpack.c.b16 %v905, %v905
    %v938 = vpack.c.b16 %v906, %v906
    %v939 = vpack.c.b16 %v907, %v907
    %v940 = vpack.c.b16 %v908, %v908
    %v941 = vpack.c.b16 %v909, %v909
    %v942 = vpack.c.b16 %v910, %v910
    %v943 = vpack.c.b16 %v911, %v911
    %v944 = vpack.c.b16 %v912, %v912
    %v945 = vpack.c.b16 %v913, %v913
    %v946 = vpack.c.b16 %v914, %v914
    %v947 = vpack.c.b16 %v915, %v915
    %v948 = vpack.c.b16 %v916, %v916
    %v949 = vpack.c.b16 %v917, %v917
    %v950 = vpack.c.b16 %v918, %v918
    %v951 = vpack.c.b16 %v919, %v919
    %v952 = vpack.c.b16 %v920, %v920
    %v953 = vpack.c.b16 %v921, %v921
    %v954 = vpack.c.b16 %v922, %v922
    %v955 = vpack.c.b16 %v923, %v923
    %v956 = vpack.c.b16 %v924, %v924
    %v957 = vpack.c.b16 %v925, %v925
    %v958 = vpack.c.b16 %v926, %v926
    %v959 = vpack.c.b16 %v927, %v927
    %v960 = vpack.c.b16 %v928, %v928
    %v961 = vpack.c.b16 %v929, %v929
    %v962 = vpack.c.b16 %v930, %v930
    %v963 = vpack.c.b16 %v931, %v931
    %v964 = vpack.c.b16 %v932, %v932
    %997 = vst [vmem:[#allocation2] sm:$0xf] %v933
    %998 = vst [vmem:[#allocation2 + $0x4] sm:$0xf] %v934
    %999 = vst [vmem:[#allocation2 + $0x8] sm:$0xf] %v935
    %1000 = vst [vmem:[#allocation2 + $0xc] sm:$0xf] %v936
    %1001 = vst [vmem:[#allocation2 + $0x10] sm:$0xf] %v937
    %1002 = vst [vmem:[#allocation2 + $0x14] sm:$0xf] %v938
    %1003 = vst [vmem:[#allocation2 + $0x18] sm:$0xf] %v939
    %1004 = vst [vmem:[#allocation2 + $0x1c] sm:$0xf] %v940
    %1005 = vst [vmem:[#allocation2 + $0x20] sm:$0xf] %v941
    %1006 = vst [vmem:[#allocation2 + $0x24] sm:$0xf] %v942
    %1007 = vst [vmem:[#allocation2 + $0x28] sm:$0xf] %v943
    %1008 = vst [vmem:[#allocation2 + $0x2c] sm:$0xf] %v944
    %1009 = vst [vmem:[#allocation2 + $0x30] sm:$0xf] %v945
    %1010 = vst [vmem:[#allocation2 + $0x34] sm:$0xf] %v946
    %1011 = vst [vmem:[#allocation2 + $0x38] sm:$0xf] %v947
    %1012 = vst [vmem:[#allocation2 + $0x3c] sm:$0xf] %v948
    %1013 = vst [vmem:[#allocation2 + $0x40] sm:$0xf] %v949
    %1014 = vst [vmem:[#allocation2 + $0x44] sm:$0xf] %v950
    %1015 = vst [vmem:[#allocation2 + $0x48] sm:$0xf] %v951
    %1016 = vst [vmem:[#allocation2 + $0x4c] sm:$0xf] %v952
    %1017 = vst [vmem:[#allocation2 + $0x50] sm:$0xf] %v953
    %1018 = vst [vmem:[#allocation2 + $0x54] sm:$0xf] %v954
    %1019 = vst [vmem:[#allocation2 + $0x58] sm:$0xf] %v955
    %1020 = vst [vmem:[#allocation2 + $0x5c] sm:$0xf] %v956
    %1021 = vst [vmem:[#allocation2 + $0x60] sm:$0xf] %v957
    %1022 = vst [vmem:[#allocation2 + $0x64] sm:$0xf] %v958
    %1023 = vst [vmem:[#allocation2 + $0x68] sm:$0xf] %v959
    %1024 = vst [vmem:[#allocation2 + $0x6c] sm:$0xf] %v960
    %1025 = vst [vmem:[#allocation2 + $0x70] sm:$0xf] %v961
    %1026 = vst [vmem:[#allocation2 + $0x74] sm:$0xf] %v962
    %1027 = vst [vmem:[#allocation2 + $0x78] sm:$0xf] %v963
    %1028 = vst [vmem:[#allocation2 + $0x7c] sm:$0xf] %v964
    // Predicated region
    $region30: #{tpu_custom_call.1} parent=1 // pred_check
      _
    $region31: #{tpu_custom_call.1} parent=1 // pred_check_branch
      %1030 = sbr.rel (0) target = $region33
    $region32: #{tpu_custom_call.1} parent=1 // pred_region
      %s1032 = ssub.s32 2048, 2048
      %1033 = vsyncadd [#allocation3], %s1032
      %s1034 = sshll.u32 [#allocation2], 4
      %s1035 = int_to_ptr.vmem [resolvable:$true] %s1034
      %1040 = dma.vmem_to_hbm [thread:$0]  %s1035, 2048, %s7, [#allocation3], 64, 64, 4
    $region33: #{tpu_custom_call.1} parent=1 // pred_fallthru
      _
    // Predicated region
    $region34: #{tpu_custom_call.1} parent=1 // pred_check
      _
    $region35: #{tpu_custom_call.1} parent=1 // pred_check_branch
      %1042 = sbr.rel (0) target = $region37
    $region36: #{tpu_custom_call.1} parent=1 // pred_region
      %1043 = dma.done [#allocation3], 2048
    $region37: #{tpu_custom_call.1} parent=1 // pred_fallthru
      _
    %1044 = vsyncpa [#allocation3], 1

</llo_original>
